<compile_context>
chip_gen: v6e
topology: v6e:2x2x1
jax: 0.10.0
libtpu: 0.0.40
codegen_flags: <defaults>
</compile_context>

<pallas_src>
import jax
import jax.numpy as jnp
from jax import lax
from jax.experimental import pallas as pl
from jax.experimental.pallas import tpu as pltpu


def _dna_kernel(x_ref, wconv_ref, bconv_ref, wfc_ref, bfc_ref, out_ref, xpad_ref):
    # x_ref    : (TB, L, Cin)     bf16  channels-last input tile
    # wconv_ref: (K, Cin, H)      bf16  conv weight, tap-major
    # bconv_ref: (1, H)           f32
    # wfc_ref  : (H, NCP)         f32   already divided by L (mean folded in), lane-padded
    # bfc_ref  : (1, NCP)         f32   lane-padded
    # out_ref  : (TB, NCP)        f32   lane-dense output
    # xpad_ref : (TB, L+2, Cin)   bf16  VMEM scratch for fused zero padding
    TB, L, Cin = x_ref.shape
    K = wconv_ref.shape[0]

    # Fused Conv1d(padding=1): copy the input tile into a zero-bordered scratch.
    xpad_ref[...] = jnp.zeros_like(xpad_ref)
    xpad_ref[:, 1:L + 1, :] = x_ref[...]

    w = wconv_ref[...]                                   # (K, Cin, H) bf16

    # Conv1d(k=3) as K tap-shifted (TB, L, Cin) x (Cin, H) MXU contractions,
    # bf16 operands, f32 accumulation.  First tap assigns (no zeros init).
    acc = lax.dot_general(
        xpad_ref[:, 0:L, :], w[0],
        dimension_numbers=(((2,), (0,)), ((), ())),
        preferred_element_type=jnp.float32)              # (TB, L, H)
    for k in range(1, K):                                # K is a static Python int (3)
        acc = acc + lax.dot_general(
            xpad_ref[:, k:k + L, :], w[k],
            dimension_numbers=(((2,), (0,)), ((), ())),
            preferred_element_type=jnp.float32)

    acc = jnp.maximum(acc + bconv_ref[...], 0.0)         # bias + ReLU, (TB, L, H) f32

    pooled = jnp.sum(acc, axis=1)                        # (TB, H); 1/L folded into wfc

    out = jnp.dot(pooled, wfc_ref[...],
                  preferred_element_type=jnp.float32) + bfc_ref[...]
    out_ref[...] = out.astype(out_ref.dtype)


def dna_classifier_forward(x, w_conv, b_conv, w_fc, b_fc, *, tile_b=8):
    """x: (B, Cin, L) float32 (PyTorch NCL).  Returns (B, num_classes) float32.

    For large batches raise `tile_b` (keep the double-buffered bf16 input tile
    plus the f32 (tile_b, L, H) intermediate under the per-generation VMEM limit).
    """
    B, Cin, L = x.shape
    H, _, K = w_conv.shape                  # PyTorch Conv1d weight: (H, Cin, K)
    NC = w_fc.shape[0]                      # PyTorch Linear weight: (NC, H)
    NCP = max(128, ((NC + 127) // 128) * 128)   # lane-dense class dim

    tile_b = min(tile_b, B)
    Bp = pl.cdiv(B, tile_b) * tile_b

    # Layout plumbing in plain JAX (single cheap pass, no HBM pad copy of x):
    x_t = jnp.transpose(x, (0, 2, 1)).astype(jnp.bfloat16)              # (B, L, Cin)
    if Bp != B:
        x_t = jnp.pad(x_t, ((0, Bp - B), (0, 0), (0, 0)))
    wconv_t = jnp.transpose(w_conv, (2, 1, 0)).astype(jnp.bfloat16)     # (K, Cin, H)
    wfc_t = (jnp.transpose(w_fc, (1, 0)) * (1.0 / L)).astype(jnp.float32)  # (H, NC)
    wfc_p = jnp.pad(wfc_t, ((0, 0), (0, NCP - NC)))                     # (H, NCP)
    bfc_p = jnp.pad(b_fc.astype(jnp.float32), (0, NCP - NC)).reshape(1, NCP)
    bconv_r = b_conv.astype(jnp.float32).reshape(1, H)

    out = pl.pallas_call(
        _dna_kernel,
        out_shape=jax.ShapeDtypeStruct((Bp, NCP), jnp.float32),
        grid_spec=pltpu.PrefetchScalarGridSpec(
            num_scalar_prefetch=0,
            grid=(Bp // tile_b,),
            in_specs=[
                pl.BlockSpec((tile_b, L, Cin), lambda i: (i, 0, 0)),    # x, tiled over B
                pl.BlockSpec((K, Cin, H), lambda i: (0, 0, 0)),         # conv weight (resident)
                pl.BlockSpec((1, H), lambda i: (0, 0)),                 # conv bias
                pl.BlockSpec((H, NCP), lambda i: (0, 0)),               # fc weight (resident)
                pl.BlockSpec((1, NCP), lambda i: (0, 0)),               # fc bias
            ],
            out_specs=pl.BlockSpec((tile_b, NCP), lambda i: (i, 0)),
            scratch_shapes=[pltpu.VMEM((tile_b, L + 2, Cin), jnp.bfloat16)],
        ),
        compiler_params=pltpu.CompilerParams(
            dimension_semantics=("parallel",),
        ),
    )(x_t, wconv_t, bconv_r, wfc_p, bfc_p)

    return out[:B, :NC]


def _reference(x, w_conv, b_conv, w_fc, b_fc):
    """Plain-JAX reference matching PyTorch semantics.

    Applies the same bf16 quantization to x / conv weight as the kernel's MXU
    operands (accumulation stays f32), so the comparison validates the kernel
    math exactly.
    """
    B, Cin, L = x.shape
    H, _, K = w_conv.shape
    xq = x.astype(jnp.bfloat16).astype(jnp.float32)
    wq = w_conv.astype(jnp.bfloat16).astype(jnp.float32)
    xpad = jnp.pad(xq, ((0, 0), (0, 0), (1, 1)))
    y = jnp.zeros((B, H, L), jnp.float32)
    for k in range(K):
        y = y + jnp.einsum('bcl,hc->bhl', xpad[:, :, k:k + L], wq[:, :, k])
    y = y + b_conv[None, :, None]
    y = jnp.maximum(y, 0.0)
    pooled = jnp.mean(y, axis=2)                         # (B, H)
    return pooled @ w_fc.T + b_fc


if __name__ == "__main__":
    # Small shapes consistent with the module: DNA one-hot channels = 4.
    B, Cin, L = 2, 4, 16          # batch, input_size, sequence length
    H, NC = 32, 3                 # hidden_size, num_classes

    key = jax.random.PRNGKey(0)
    k1, k2, k3, k4, k5 = jax.random.split(key, 5)

    # One-hot DNA input in PyTorch NCL layout (exactly representable in bf16).
    bases = jax.random.randint(k1, (B, L), 0, Cin)
    x = jnp.transpose(jax.nn.one_hot(bases, Cin, dtype=jnp.float32), (0, 2, 1))  # (B, Cin, L)

    # Deterministic synthetic parameters (shapes match the nn.Module):
    w_conv = 0.1 * jax.random.normal(k2, (H, Cin, 3), dtype=jnp.float32)   # Conv1d weight
    b_conv = 0.1 * jax.random.normal(k3, (H,), dtype=jnp.float32)          # Conv1d bias
    w_fc   = 0.1 * jax.random.normal(k4, (NC, H), dtype=jnp.float32)       # Linear weight
    b_fc   = 0.1 * jax.random.normal(k5, (NC,), dtype=jnp.float32)         # Linear bias

    out = jax.block_until_ready(dna_classifier_forward(x, w_conv, b_conv, w_fc, b_fc))

    ref = _reference(x, w_conv, b_conv, w_fc, b_fc)
    assert out.shape == (B, NC)
    assert jnp.allclose(out, ref, atol=1e-4, rtol=1e-4), (out, ref)

    print("KERNEL_OK")
</pallas_src>

<mosaic_0001>
module attributes {stable_mosaic.version = 11 : i64} {
  func.func @_dna_kernel(%arg0: i32, %arg1: memref<2x16x4xbf16, #tpu.memory_space<vmem>>, %arg2: memref<3x4x32xbf16, #tpu.memory_space<vmem>>, %arg3: memref<1x32xf32, #tpu.memory_space<vmem>>, %arg4: memref<32x128xf32, #tpu.memory_space<vmem>>, %arg5: memref<1x128xf32, #tpu.memory_space<vmem>>, %arg6: memref<2x128xf32, #tpu.memory_space<vmem>>, %arg7: memref<2x18x4xbf16, #tpu.memory_space<vmem>>) attributes {dimension_semantics = [#tpu.dimension_semantics<parallel>], iteration_bounds = array<i64: 1>, scalar_prefetch = 0 : i64, scratch_operands = 1 : i64, tpu.core_type = #tpu.core_type<tc>, window_params = [{transform_indices = @transform_0, window_bounds = array<i64: 2, 16, 4>}, {pipeline_mode = #tpu.pipeline_mode<synchronous>, transform_indices = @transform_1, window_bounds = array<i64: 3, 4, 32>}, {pipeline_mode = #tpu.pipeline_mode<synchronous>, transform_indices = @transform_2, window_bounds = array<i64: 1, 32>}, {pipeline_mode = #tpu.pipeline_mode<synchronous>, transform_indices = @transform_3, window_bounds = array<i64: 32, 128>}, {pipeline_mode = #tpu.pipeline_mode<synchronous>, transform_indices = @transform_4, window_bounds = array<i64: 1, 128>}, {transform_indices = @transform_5, window_bounds = array<i64: 2, 128>}]} {
    %cst = arith.constant 0.000000e+00 : bf16
    %0 = vector.broadcast %cst : bf16 to vector<2x18x4xbf16>
    %c0 = arith.constant 0 : index
    %c0_0 = arith.constant 0 : index
    %c0_1 = arith.constant 0 : index
    %1 = vector.load %arg7[%c0, %c0_0, %c0_1] : memref<2x18x4xbf16, #tpu.memory_space<vmem>>, vector<2x18x4xbf16>
    tpu.vector_store %arg7[%c0, %c0_0, %c0_1], %0 {strides = array<i32>} : memref<2x18x4xbf16, #tpu.memory_space<vmem>>, vector<2x18x4xbf16>,
    %c0_2 = arith.constant 0 : index
    %c0_3 = arith.constant 0 : index
    %c0_4 = arith.constant 0 : index
    %2 = vector.load %arg1[%c0_2, %c0_3, %c0_4] : memref<2x16x4xbf16, #tpu.memory_space<vmem>>, vector<2x16x4xbf16>
    %c0_5 = arith.constant 0 : index
    %c1 = arith.constant 1 : index
    %c0_6 = arith.constant 0 : index
    %3 = vector.load %arg7[%c0_5, %c1, %c0_6] : memref<2x18x4xbf16, #tpu.memory_space<vmem>>, vector<2x16x4xbf16>
    tpu.vector_store %arg7[%c0_5, %c1, %c0_6], %2 {strides = array<i32>} : memref<2x18x4xbf16, #tpu.memory_space<vmem>>, vector<2x16x4xbf16>,
    %c0_7 = arith.constant 0 : index
    %c0_8 = arith.constant 0 : index
    %c0_9 = arith.constant 0 : index
    %4 = vector.load %arg2[%c0_7, %c0_8, %c0_9] : memref<3x4x32xbf16, #tpu.memory_space<vmem>>, vector<3x4x32xbf16>
    %c0_10 = arith.constant 0 : index
    %c0_11 = arith.constant 0 : index
    %c0_12 = arith.constant 0 : index
    %5 = vector.load %arg7[%c0_10, %c0_11, %c0_12] : memref<2x18x4xbf16, #tpu.memory_space<vmem>>, vector<2x16x4xbf16>
    %6 = vector.extract_strided_slice %4 {offsets = [0, 0, 0], sizes = [1, 4, 32], strides = [1, 1, 1]} : vector<3x4x32xbf16> to vector<1x4x32xbf16>
    %7 = vector.shape_cast %6 : vector<1x4x32xbf16> to vector<4x32xbf16>
    %cst_13 = arith.constant dense<0.000000e+00> : vector<2x16x32xf32>
    %8 = tpu.matmul %5, %7, %cst_13 {dimension_numbers = #tpu.dot_dimension_numbers<[2], [0], [0, 1], [1], [0, 0, 0, 1, 1, 1], [], []>} : vector<2x16x4xbf16>, vector<4x32xbf16>, vector<2x16x32xf32> -> vector<2x16x32xf32>
    %c0_14 = arith.constant 0 : index
    %c1_15 = arith.constant 1 : index
    %c0_16 = arith.constant 0 : index
    %9 = vector.load %arg7[%c0_14, %c1_15, %c0_16] : memref<2x18x4xbf16, #tpu.memory_space<vmem>>, vector<2x16x4xbf16>
    %10 = vector.extract_strided_slice %4 {offsets = [1, 0, 0], sizes = [1, 4, 32], strides = [1, 1, 1]} : vector<3x4x32xbf16> to vector<1x4x32xbf16>
    %11 = vector.shape_cast %10 : vector<1x4x32xbf16> to vector<4x32xbf16>
    %cst_17 = arith.constant dense<0.000000e+00> : vector<2x16x32xf32>
    %12 = tpu.matmul %9, %11, %cst_17 {dimension_numbers = #tpu.dot_dimension_numbers<[2], [0], [0, 1], [1], [0, 0, 0, 1, 1, 1], [], []>} : vector<2x16x4xbf16>, vector<4x32xbf16>, vector<2x16x32xf32> -> vector<2x16x32xf32>
    %13 = arith.addf %8, %12 : vector<2x16x32xf32>
    %c0_18 = arith.constant 0 : index
    %c2 = arith.constant 2 : index
    %c0_19 = arith.constant 0 : index
    %14 = vector.load %arg7[%c0_18, %c2, %c0_19] : memref<2x18x4xbf16, #tpu.memory_space<vmem>>, vector<2x16x4xbf16>
    %15 = vector.extract_strided_slice %4 {offsets = [2, 0, 0], sizes = [1, 4, 32], strides = [1, 1, 1]} : vector<3x4x32xbf16> to vector<1x4x32xbf16>
    %16 = vector.shape_cast %15 : vector<1x4x32xbf16> to vector<4x32xbf16>
    %cst_20 = arith.constant dense<0.000000e+00> : vector<2x16x32xf32>
    %17 = tpu.matmul %14, %16, %cst_20 {dimension_numbers = #tpu.dot_dimension_numbers<[2], [0], [0, 1], [1], [0, 0, 0, 1, 1, 1], [], []>} : vector<2x16x4xbf16>, vector<4x32xbf16>, vector<2x16x32xf32> -> vector<2x16x32xf32>
    %18 = arith.addf %13, %17 : vector<2x16x32xf32>
    %c0_21 = arith.constant 0 : index
    %c0_22 = arith.constant 0 : index
    %19 = vector.load %arg3[%c0_21, %c0_22] : memref<1x32xf32, #tpu.memory_space<vmem>>, vector<1x32xf32>
    %20 = vector.shape_cast %19 : vector<1x32xf32> to vector<1x1x32xf32>
    %21 = vector.broadcast %20 : vector<1x1x32xf32> to vector<2x16x32xf32>
    %22 = arith.addf %18, %21 : vector<2x16x32xf32>
    %cst_23 = arith.constant 0.000000e+00 : f32
    %23 = vector.broadcast %cst_23 : f32 to vector<2x16x32xf32>
    %24 = arith.maximumf %22, %23 : vector<2x16x32xf32>
    %cst_24 = arith.constant dense<0.000000e+00> : vector<2x32xf32>
    %25 = vector.multi_reduction <add>, %24, %cst_24 [1] : vector<2x16x32xf32> to vector<2x32xf32>
    %c0_25 = arith.constant 0 : index
    %c0_26 = arith.constant 0 : index
    %26 = vector.load %arg4[%c0_25, %c0_26] : memref<32x128xf32, #tpu.memory_space<vmem>>, vector<32x128xf32>
    %cst_27 = arith.constant dense<0.000000e+00> : vector<2x128xf32>
    %27 = tpu.matmul %25, %26, %cst_27 {dimension_numbers = #tpu.dot_dimension_numbers<[1], [0], [0], [1], [0, 0, 1, 1], [], []>} : vector<2x32xf32>, vector<32x128xf32>, vector<2x128xf32> -> vector<2x128xf32>
    %c0_28 = arith.constant 0 : index
    %c0_29 = arith.constant 0 : index
    %28 = vector.load %arg5[%c0_28, %c0_29] : memref<1x128xf32, #tpu.memory_space<vmem>>, vector<1x128xf32>
    %29 = vector.broadcast %28 : vector<1x128xf32> to vector<2x128xf32>
    %30 = arith.addf %27, %29 : vector<2x128xf32>
    %c0_30 = arith.constant 0 : index
    %c0_31 = arith.constant 0 : index
    %31 = vector.load %arg6[%c0_30, %c0_31] : memref<2x128xf32, #tpu.memory_space<vmem>>, vector<2x128xf32>
    tpu.vector_store %arg6[%c0_30, %c0_31], %30 {strides = array<i32>} : memref<2x128xf32, #tpu.memory_space<vmem>>, vector<2x128xf32>,
    return
  }
  func.func @transform_0(%arg0: i32) -> (i32, i32, i32) {
    %c0_i32 = arith.constant 0 : i32
    %c0_i32_0 = arith.constant 0 : i32
    %c0_i32_1 = arith.constant 0 : i32
    return %arg0, %c0_i32, %c0_i32_0 : i32, i32, i32
  }
  func.func @transform_1(%arg0: i32) -> (i32, i32, i32) {
    %c0_i32 = arith.constant 0 : i32
    %c0_i32_0 = arith.constant 0 : i32
    %c0_i32_1 = arith.constant 0 : i32
    %c0_i32_2 = arith.constant 0 : i32
    return %c0_i32, %c0_i32_0, %c0_i32_1 : i32, i32, i32
  }
  func.func @transform_2(%arg0: i32) -> (i32, i32) {
    %c0_i32 = arith.constant 0 : i32
    %c0_i32_0 = arith.constant 0 : i32
    %c0_i32_1 = arith.constant 0 : i32
    return %c0_i32, %c0_i32_0 : i32, i32
  }
  func.func @transform_3(%arg0: i32) -> (i32, i32) {
    %c0_i32 = arith.constant 0 : i32
    %c0_i32_0 = arith.constant 0 : i32
    %c0_i32_1 = arith.constant 0 : i32
    return %c0_i32, %c0_i32_0 : i32, i32
  }
  func.func @transform_4(%arg0: i32) -> (i32, i32) {
    %c0_i32 = arith.constant 0 : i32
    %c0_i32_0 = arith.constant 0 : i32
    %c0_i32_1 = arith.constant 0 : i32
    return %c0_i32, %c0_i32_0 : i32, i32
  }
  func.func @transform_5(%arg0: i32) -> (i32, i32) {
    %c0_i32 = arith.constant 0 : i32
    %c0_i32_0 = arith.constant 0 : i32
    return %arg0, %c0_i32 : i32, i32
  }
}

</mosaic_0001>

<llo_original>
// kernel: tpu_custom_call.1
$region0: #{tpu_custom_call.1}
  #allocation0 [shape = 'u32[]', space=smem, size = 0x4, offset = 0x4, fixed_abs, tag = 'smem constant byte address 0x4 - core index']
  #allocation1 [shape = 'u32[144,128]{1,0:T(1,128)}', space=vmem, size = 0x12000, scoped, tag = 'internal scratch']
  #allocation2 [shape = 'bf16[2,18,4]{2,1,0:T(8,128)(2,1)}', space=vmem, size = 0x3000, scoped, tag = 'scratch operand']
  %s0 = inlined_call_operand.vmem [shape: bf16[2,16,4], index: 0, kind: input, shape index: {}]
  %s1 = inlined_call_operand.vmem [shape: bf16[3,4,32], index: 1, kind: input, shape index: {}]
  %s2 = inlined_call_operand.vmem [shape: f32[1,32], index: 2, kind: input, shape index: {}]
  %s3 = inlined_call_operand.hbm [shape: f32[32,128], index: 3, kind: input, shape index: {}]
  %s4 = inlined_call_operand.vmem [shape: f32[1,128], index: 4, kind: input, shape index: {}]
  %s5 = inlined_call_operand.hbm [shape: f32[2,128], index: 5, kind: output, shape index: {}]
  %s6 = sld [smem:[#allocation0]]
  $region34: #{tpu_custom_call.1} parent=0
    _
  %s8 = ssub.s32 1, %s6
  %s9 = scalar_select 0, %s8, %s6
  $region1: #{tpu_custom_call.1} parent=0
    #allocation3 [shape = 'u8[16384]{0}', space=vmem, size = 0x4000, scoped, tag = 'input window, operand 3, single buffered']
    #allocation4 [shape = 's32[1]{0}', space=sflag, size = 0x4, scoped, tag = 'scoped memory for tpu_custom_call.1']
    #allocation5 [shape = 's32[1]{0}', space=sflag, size = 0x4, scoped, tag = 'scoped memory for tpu_custom_call.1']
    #allocation6 [shape = 'u8[1024]{0}', space=vmem, size = 0x400, scoped, tag = 'output window, operand 0, single buffered']
    %10 = vsyncpa [#allocation4], 0
    %11 = vsyncpa [#allocation5], 0
    // Predicated region
    $region2: #{tpu_custom_call.1} parent=1 // pred_check
      _
    $region3: #{tpu_custom_call.1} parent=1 // pred_check_branch
      %13 = sbr.rel (0) target = $region5
    $region4: #{tpu_custom_call.1} parent=1 // pred_region
      _
    $region5: #{tpu_custom_call.1} parent=1 // pred_fallthru
      _
    // Predicated region
    $region6: #{tpu_custom_call.1} parent=1 // pred_check
      _
    $region7: #{tpu_custom_call.1} parent=1 // pred_check_branch
      %15 = sbr.rel (0) target = $region9
    $region8: #{tpu_custom_call.1} parent=1 // pred_region
      _
    $region9: #{tpu_custom_call.1} parent=1 // pred_fallthru
      _
    // Predicated region
    $region10: #{tpu_custom_call.1} parent=1 // pred_check
      _
    $region11: #{tpu_custom_call.1} parent=1 // pred_check_branch
      %17 = sbr.rel (0) target = $region13
    $region12: #{tpu_custom_call.1} parent=1 // pred_region
      _
    $region13: #{tpu_custom_call.1} parent=1 // pred_fallthru
      _
    // Predicated region
    $region14: #{tpu_custom_call.1} parent=1 // pred_check
      _
    $region15: #{tpu_custom_call.1} parent=1 // pred_check_branch
      %19 = sbr.rel (0) target = $region17
    $region16: #{tpu_custom_call.1} parent=1 // pred_region
      %s21 = ssub.s32 512, 512
      %22 = vsyncadd [#allocation4], %s21
      %s23 = sshll.u32 [#allocation3], 4
      %s24 = int_to_ptr.vmem [resolvable:$true] %s23
      %29 = dma.hbm_to_vmem [thread:$0]  %s3, 512, %s24, [#allocation4], 128, 128, 8
    $region17: #{tpu_custom_call.1} parent=1 // pred_fallthru
      _
    // Predicated region
    $region18: #{tpu_custom_call.1} parent=1 // pred_check
      _
    $region19: #{tpu_custom_call.1} parent=1 // pred_check_branch
      %31 = sbr.rel (0) target = $region21
    $region20: #{tpu_custom_call.1} parent=1 // pred_region
      _
    $region21: #{tpu_custom_call.1} parent=1 // pred_fallthru
      _
    // Predicated region
    $region22: #{tpu_custom_call.1} parent=1 // pred_check
      _
    $region23: #{tpu_custom_call.1} parent=1 // pred_check_branch
      %33 = sbr.rel (0) target = $region25
    $region24: #{tpu_custom_call.1} parent=1 // pred_region
      %34 = dma.done [#allocation4], 512
    $region25: #{tpu_custom_call.1} parent=1 // pred_fallthru
      _
    %vm36 = vcmask 27648
    %37 = vst.msk [vmem:[#allocation2] sm:$0xf] %vm36, 0
    %38 = vst.msk [vmem:[#allocation2 + $0x4] sm:$0xf] %vm36, 0
    %vm39 = vcmask 24576
    %40 = vst.msk [vmem:[#allocation2 + $0x8] sm:$0x1] %vm39, 0
    %41 = vst.msk [vmem:[#allocation2 + $0xc] sm:$0xf] %vm36, 0
    %42 = vst.msk [vmem:[#allocation2 + $0x10] sm:$0xf] %vm36, 0
    %43 = vst.msk [vmem:[#allocation2 + $0x14] sm:$0x1] %vm39, 0
    %v44 = vld [vmem:[%s0] sm:$0xf]
    %v45 = vld [vmem:[%s0 + $0x4] sm:$0xf]
    %v46 = vld [vmem:[%s0 + $0x8] sm:$0xf]
    %v47 = vld [vmem:[%s0 + $0xc] sm:$0xf]
    %vm48 = vsmask.f32 256
    %vm49 = vsmask.f32 4368
    %vm50 = vmor %vm48, %vm49
    %v52 = vshrl.u32 %v44, 16
    %v54 = vrot.slane %v52, 7
    %v55 = vshll.u32 %v44, 16
    %v57 = vor.u32 %v54, %v55
    %v58 = vrot.slane %v54, 4
    %v60 = vshrl.u32 %v45, 16
    %v62 = vrot.slane %v60, 7
    %v63 = vshll.u32 %v45, 16
    %v65 = vor.u32 %v62, %v63
    %v66 = vsel %vm50, %v58, %v65
    %v67 = vrot.slane %v62, 4
    %v69 = vshrl.u32 %v46, 16
    %v71 = vrot.slane %v69, 7
    %v72 = vshll.u32 %v46, 16
    %v74 = vor.u32 %v71, %v72
    %v75 = vrot.slane %v71, 4
    %v77 = vshrl.u32 %v47, 16
    %v79 = vrot.slane %v77, 7
    %v80 = vshll.u32 %v47, 16
    %v82 = vor.u32 %v79, %v80
    %v83 = vsel %vm50, %v75, %v82
    %v84 = vrot.slane %v79, 4
    %vm91 = vcmask 27648
    %vm92 = vsmask.f32 7938
    %vm93 = vmand %vm91, %vm92
    %v94 = vld [vmem:[#allocation2] sm:$0xf]
    %v95 = vsel %vm93, %v57, %v94
    %96 = vst [vmem:[#allocation2] sm:$0xf] %v95
    %97 = vst.msk [vmem:[#allocation2 + $0x4] sm:$0xf] %vm36, %v66
    %vm98 = vcmask 24576
    %vm99 = vmand %vm98, %vm48
    %v100 = vld [vmem:[#allocation2 + $0x8] sm:$0x1]
    %v101 = vsel %vm99, %v67, %v100
    %102 = vst [vmem:[#allocation2 + $0x8] sm:$0x1] %v101
    %v103 = vld [vmem:[#allocation2 + $0xc] sm:$0xf]
    %v104 = vsel %vm93, %v74, %v103
    %105 = vst [vmem:[#allocation2 + $0xc] sm:$0xf] %v104
    %106 = vst.msk [vmem:[#allocation2 + $0x10] sm:$0xf] %vm36, %v83
    %v107 = vld [vmem:[#allocation2 + $0x14] sm:$0x1]
    %v108 = vsel %vm99, %v84, %v107
    %109 = vst [vmem:[#allocation2 + $0x14] sm:$0x1] %v108
    %v110 = vld [vmem:[%s1] sm:$0x3]
    %v111 = vld [vmem:[%s1 + $0x2] sm:$0x3]
    %v112 = vld [vmem:[%s1 + $0x4] sm:$0x3]
    %v113 = vld [vmem:[#allocation2] sm:$0xf]
    %v114 = vld [vmem:[#allocation2 + $0x4] sm:$0xf]
    %v115 = vld [vmem:[#allocation2 + $0xc] sm:$0xf]
    %v116 = vld [vmem:[#allocation2 + $0x10] sm:$0xf]
    %v117 = vld [vmem:[#allocation2 + $0x8] sm:$0x1]
    %v118 = vld [vmem:[#allocation2 + $0x14] sm:$0x1]
    %vm119 = vsmask.f32 3328
    %vm120 = vsmask.f32 7440
    %vm121 = vmor %vm119, %vm120
    %v123 = vshrl.u32 %v113, 16
    %v125 = vrot.slane %v123, 4
    %v126 = vshll.u32 %v113, 16
    %v128 = vrot.slane %v126, 5
    %v129 = vor.u32 %v125, %v128
    %v130 = vrot.slane %v129, 4
    %v132 = vshll.u32 %v114, 16
    %v134 = vrot.slane %v132, 5
    %v135 = vsel %vm121, %v130, %v134
    %v136 = vshrl.u32 %v114, 16
    %v138 = vrot.slane %v136, 4
    %v139 = vor.u32 %v138, %v134
    %v140 = vrot.slane %v139, 4
    %v142 = vshll.u32 %v117, 16
    %v144 = vrot.slane %v142, 5
    %v145 = vsel %vm121, %v140, %v144
    %v147 = vshrl.u32 %v115, 16
    %v149 = vrot.slane %v147, 4
    %v150 = vshll.u32 %v115, 16
    %v152 = vrot.slane %v150, 5
    %v153 = vor.u32 %v149, %v152
    %v154 = vrot.slane %v153, 4
    %v156 = vshll.u32 %v116, 16
    %v158 = vrot.slane %v156, 5
    %v159 = vsel %vm121, %v154, %v158
    %v160 = vshrl.u32 %v116, 16
    %v162 = vrot.slane %v160, 4
    %v163 = vor.u32 %v162, %v158
    %v164 = vrot.slane %v163, 4
    %v166 = vshll.u32 %v118, 16
    %v168 = vrot.slane %v166, 5
    %v169 = vsel %vm121, %v164, %v168
    %v170 = vunpack.c.l.b16 %v135
    %v171 = vunpack.c.l.b16 %v145
    %v172 = vunpack.c.l.b16 %v159
    %v173 = vunpack.c.l.b16 %v169
    %v174 = vpack.c.b16 %v171, %v170
    %v175 = vpack.c.b16 %v173, %v172
    %vm176 = vcmask 31744
    %v178 = vsel %vm176, %v174, 0
    %v181 = vsel %vm176, %v175, 0
    %vm183 = vcmask 1041408
    %v185 = vsel %vm183, %v111, 0
    %187 = vmatprep.subr.bf16.mxu0 0
    %188 = vmatpush1.bf16.msra.mxu0 0
    %189 = vmatprep.subr.bf16.mxu0 0
    %190 = vmatpush1.bf16.msra.mxu0 0
    %191 = vmatprep.subr.bf16.mxu0 0
    %192 = vmatpush1.bf16.msra.mxu0 0
    %193 = vmatprep.subr.bf16.mxu0 0
    %194 = vmatpush1.bf16.msra.mxu0 0
    %195 = vmatprep.subr.bf16.mxu0 0
    %196 = vmatpush1.bf16.msra.mxu0 0
    %197 = vmatprep.subr.bf16.mxu0 0
    %198 = vmatpush1.bf16.msra.mxu0 0
    %199 = vmatprep.subr.bf16.mxu0 0
    %200 = vmatpush1.bf16.msra.mxu0 0
    %201 = vmatprep.subr.bf16.mxu0 0
    %202 = vmatpush1.bf16.msra.mxu0 %v185
    %203 = vmatprep.subr.bf16.mxu0 0
    %204 = vmatpush2.bf16.msra.mxu0 0
    %205 = vmatprep.subr.bf16.mxu0 0
    %206 = vmatpush2.bf16.msra.mxu0 0
    %207 = vmatprep.subr.bf16.mxu0 0
    %208 = vmatpush2.bf16.msra.mxu0 0
    %209 = vmatprep.subr.bf16.mxu0 0
    %210 = vmatpush2.bf16.msra.mxu0 0
    %211 = vmatprep.subr.bf16.mxu0 0
    %212 = vmatpush2.bf16.msra.mxu0 0
    %213 = vmatprep.subr.bf16.mxu0 0
    %214 = vmatpush2.bf16.msra.mxu0 0
    %215 = vmatprep.subr.bf16.mxu0 0
    %216 = vmatpush2.bf16.msra.mxu0 0
    %217 = vmatprep.subr.bf16.mxu0 0
    %218 = vmatpush2.bf16.msra.mxu0 0
    %219 = vmatprep.mubr.bf16.mxu0 0
    %220 = vmatmul.mubr.bf16.gmra.mxu0 %v178
    %v221 = vpop.f32.mrf.mxu0
    %v222 = vadd.f32 0.0, %v221
    %v223 = vpop.f32.mrf.mxu0
    %v224 = vpop.f32.mrf.mxu0
    %v225 = vadd.f32 0.0, %v224
    %v226 = vpop.f32.mrf.mxu0
    %227 = vmatprep.mubr.bf16.mxu0 0
    %228 = vmatmul.mubr.bf16.gmra.mxu0 %v181
    %v229 = vpop.f32.mrf.mxu0
    %v230 = vadd.f32 0.0, %v229
    %v231 = vpop.f32.mrf.mxu0
    %v232 = vpop.f32.mrf.mxu0
    %v233 = vadd.f32 0.0, %v232
    %v234 = vpop.f32.mrf.mxu0
    %235 = vdwg.mxu0
    %v240 = vunpack.c.l.b16 %v113
    %v241 = vunpack.c.l.b16 %v114
    %v242 = vunpack.c.l.b16 %v115
    %v243 = vunpack.c.l.b16 %v116
    %v244 = vpack.c.b16 %v241, %v240
    %v245 = vpack.c.b16 %v243, %v242
    %v247 = vsel %vm176, %v244, 0
    %v250 = vsel %vm176, %v245, 0
    %v253 = vsel %vm183, %v110, 0
    %255 = vmatprep.subr.bf16.mxu0 0
    %256 = vmatpush1.bf16.msra.mxu0 0
    %257 = vmatprep.subr.bf16.mxu0 0
    %258 = vmatpush1.bf16.msra.mxu0 0
    %259 = vmatprep.subr.bf16.mxu0 0
    %260 = vmatpush1.bf16.msra.mxu0 0
    %261 = vmatprep.subr.bf16.mxu0 0
    %262 = vmatpush1.bf16.msra.mxu0 0
    %263 = vmatprep.subr.bf16.mxu0 0
    %264 = vmatpush1.bf16.msra.mxu0 0
    %265 = vmatprep.subr.bf16.mxu0 0
    %266 = vmatpush1.bf16.msra.mxu0 0
    %267 = vmatprep.subr.bf16.mxu0 0
    %268 = vmatpush1.bf16.msra.mxu0 0
    %269 = vmatprep.subr.bf16.mxu0 0
    %270 = vmatpush1.bf16.msra.mxu0 %v253
    %271 = vmatprep.subr.bf16.mxu0 0
    %272 = vmatpush2.bf16.msra.mxu0 0
    %273 = vmatprep.subr.bf16.mxu0 0
    %274 = vmatpush2.bf16.msra.mxu0 0
    %275 = vmatprep.subr.bf16.mxu0 0
    %276 = vmatpush2.bf16.msra.mxu0 0
    %277 = vmatprep.subr.bf16.mxu0 0
    %278 = vmatpush2.bf16.msra.mxu0 0
    %279 = vmatprep.subr.bf16.mxu0 0
    %280 = vmatpush2.bf16.msra.mxu0 0
    %281 = vmatprep.subr.bf16.mxu0 0
    %282 = vmatpush2.bf16.msra.mxu0 0
    %283 = vmatprep.subr.bf16.mxu0 0
    %284 = vmatpush2.bf16.msra.mxu0 0
    %285 = vmatprep.subr.bf16.mxu0 0
    %286 = vmatpush2.bf16.msra.mxu0 0
    %287 = vmatprep.mubr.bf16.mxu0 0
    %288 = vmatmul.mubr.bf16.gmra.mxu0 %v247
    %v289 = vpop.f32.mrf.mxu0
    %v290 = vadd.f32 %v222, %v289
    %v291 = vpop.f32.mrf.mxu0
    %v292 = vpop.f32.mrf.mxu0
    %v293 = vadd.f32 %v225, %v292
    %v294 = vpop.f32.mrf.mxu0
    %295 = vmatprep.mubr.bf16.mxu0 0
    %296 = vmatmul.mubr.bf16.gmra.mxu0 %v250
    %v297 = vpop.f32.mrf.mxu0
    %v298 = vadd.f32 %v230, %v297
    %v299 = vpop.f32.mrf.mxu0
    %v300 = vpop.f32.mrf.mxu0
    %v301 = vadd.f32 %v233, %v300
    %v302 = vpop.f32.mrf.mxu0
    %303 = vdwg.mxu0
    %v304 = vld [vmem:[#allocation2] sm:$0xe]
    %v305 = vld [vmem:[#allocation2 + $0xc] sm:$0xe]
    %vm310 = vcmask 1042432
    %vm311 = vcmask 1046532
    %vm312 = vmor %vm310, %vm311
    %v313 = vrot.slane %v304, 5
    %v314 = vrot.slane %v313, 4
    %v315 = vrot.slane %v114, 5
    %v316 = vsel %vm312, %v314, %v315
    %v317 = vrot.slane %v315, 4
    %v318 = vrot.slane %v117, 5
    %v319 = vsel %vm312, %v317, %v318
    %v320 = vrot.slane %v305, 5
    %v321 = vrot.slane %v320, 4
    %v322 = vrot.slane %v116, 5
    %v323 = vsel %vm312, %v321, %v322
    %v324 = vrot.slane %v322, 4
    %v325 = vrot.slane %v118, 5
    %v326 = vsel %vm312, %v324, %v325
    %v327 = vunpack.c.l.b16 %v316
    %v328 = vunpack.c.l.b16 %v319
    %v329 = vunpack.c.l.b16 %v323
    %v330 = vunpack.c.l.b16 %v326
    %v331 = vpack.c.b16 %v328, %v327
    %v332 = vpack.c.b16 %v330, %v329
    %v334 = vsel %vm176, %v331, 0
    %v337 = vsel %vm176, %v332, 0
    %v340 = vsel %vm183, %v112, 0
    %342 = vmatprep.subr.bf16.mxu0 0
    %343 = vmatpush1.bf16.msra.mxu0 0
    %344 = vmatprep.subr.bf16.mxu0 0
    %345 = vmatpush1.bf16.msra.mxu0 0
    %346 = vmatprep.subr.bf16.mxu0 0
    %347 = vmatpush1.bf16.msra.mxu0 0
    %348 = vmatprep.subr.bf16.mxu0 0
    %349 = vmatpush1.bf16.msra.mxu0 0
    %350 = vmatprep.subr.bf16.mxu0 0
    %351 = vmatpush1.bf16.msra.mxu0 0
    %352 = vmatprep.subr.bf16.mxu0 0
    %353 = vmatpush1.bf16.msra.mxu0 0
    %354 = vmatprep.subr.bf16.mxu0 0
    %355 = vmatpush1.bf16.msra.mxu0 0
    %356 = vmatprep.subr.bf16.mxu0 0
    %357 = vmatpush1.bf16.msra.mxu0 %v340
    %358 = vmatprep.subr.bf16.mxu0 0
    %359 = vmatpush2.bf16.msra.mxu0 0
    %360 = vmatprep.subr.bf16.mxu0 0
    %361 = vmatpush2.bf16.msra.mxu0 0
    %362 = vmatprep.subr.bf16.mxu0 0
    %363 = vmatpush2.bf16.msra.mxu0 0
    %364 = vmatprep.subr.bf16.mxu0 0
    %365 = vmatpush2.bf16.msra.mxu0 0
    %366 = vmatprep.subr.bf16.mxu0 0
    %367 = vmatpush2.bf16.msra.mxu0 0
    %368 = vmatprep.subr.bf16.mxu0 0
    %369 = vmatpush2.bf16.msra.mxu0 0
    %370 = vmatprep.subr.bf16.mxu0 0
    %371 = vmatpush2.bf16.msra.mxu0 0
    %372 = vmatprep.subr.bf16.mxu0 0
    %373 = vmatpush2.bf16.msra.mxu0 0
    %374 = vmatprep.mubr.bf16.mxu0 0
    %375 = vmatmul.mubr.bf16.gmra.mxu0 %v334
    %v376 = vpop.f32.mrf.mxu0
    %v377 = vadd.f32 0.0, %v376
    %v378 = vpop.f32.mrf.mxu0
    %v379 = vpop.f32.mrf.mxu0
    %v380 = vadd.f32 0.0, %v379
    %v381 = vpop.f32.mrf.mxu0
    %382 = vmatprep.mubr.bf16.mxu0 0
    %383 = vmatmul.mubr.bf16.gmra.mxu0 %v337
    %v384 = vpop.f32.mrf.mxu0
    %v385 = vadd.f32 0.0, %v384
    %v386 = vpop.f32.mrf.mxu0
    %v387 = vpop.f32.mrf.mxu0
    %v388 = vadd.f32 0.0, %v387
    %v389 = vpop.f32.mrf.mxu0
    %390 = vdwg.mxu0
    %v391 = vadd.f32 %v290, %v377
    %v392 = vadd.f32 %v293, %v380
    %v393 = vadd.f32 %v298, %v385
    %v394 = vadd.f32 %v301, %v388
    %v395 = vld [vmem:[%s2] sm:$0x1]
    %v397 = vlaneseq
    %v398 = vshrl.u32 %v397, 7
    %v399 = vsub.s32 0, %v398
    %v400 = vrot.slane %v395, %v399
    %v402 = vadd.f32 %v391, %v400
    %v403 = vadd.f32 %v392, %v400
    %v404 = vadd.f32 %v393, %v400
    %v405 = vadd.f32 %v394, %v400
    %v406 = vmax.f32 %v402, 0.0
    %v407 = vmax.f32 %v403, 0.0
    %v408 = vmax.f32 %v404, 0.0
    %v409 = vmax.f32 %v405, 0.0
    %vm410 = vcmask 261120
    %v411 = vsel %vm410, %v406, 0.0
    %v412 = vsel %vm410, %v407, 0.0
    %v413 = vadd.f32 %v411, %v412
    %v414 = vrot.slane %v413, 4
    %v415 = vadd.f32 %v413, %v414
    %v416 = vrot.slane %v415, 2
    %v417 = vadd.f32 %v415, %v416
    %v418 = vrot.slane %v417, 1
    %v419 = vadd.f32 %v417, %v418
    %v420 = vsel %vm410, %v408, 0.0
    %v421 = vsel %vm410, %v409, 0.0
    %v422 = vadd.f32 %v420, %v421
    %v423 = vrot.slane %v422, 4
    %v424 = vadd.f32 %v422, %v423
    %v425 = vrot.slane %v424, 2
    %v426 = vadd.f32 %v424, %v425
    %v427 = vrot.slane %v426, 1
    %v428 = vadd.f32 %v426, %v427
    %v429 = vld [vmem:[#allocation3] sm:$0xff]
    %v430 = vld [vmem:[#allocation3 + $0x8] sm:$0xff]
    %v431 = vld [vmem:[#allocation3 + $0x10] sm:$0xff]
    %v432 = vld [vmem:[#allocation3 + $0x18] sm:$0xff]
    %v433 = vld [vmem:[%s4] sm:$0x1]
    %v435 = vlaneseq
    %v436 = vshrl.u32 %v435, 7
    %v437 = vsub.s32 0, %v436
    %v438 = vrot.slane %v433, %v437
    %vm442 = vcmask 1041409
    %v443 = vsel %vm442, %v428, %v419
    %v444 = vsel %vm410, %v443, 0
    %446 = vmatprep.subr.mxu0 0.0
    %447 = vmatpush1.msra.mxu0 0.0
    %448 = vmatprep.subr.mxu0 0.0
    %449 = vmatpush1.msra.mxu0 0.0
    %450 = vmatprep.subr.mxu0 0.0
    %451 = vmatpush1.msra.mxu0 0.0
    %452 = vmatprep.subr.mxu0 0.0
    %453 = vmatpush1.msra.mxu0 0.0
    %454 = vmatprep.subr.mxu0 0.0
    %455 = vmatpush1.msra.mxu0 0.0
    %456 = vmatprep.subr.mxu0 0.0
    %457 = vmatpush1.msra.mxu0 0.0
    %458 = vmatprep.subr.mxu0 0.0
    %459 = vmatpush1.msra.mxu0 0.0
    %460 = vmatprep.subr.mxu0 0.0
    %461 = vmatpush1.msra.mxu0 0.0
    %462 = vmatprep.subr.mxu0 0.0
    %463 = vmatpush1.msra.mxu0 0.0
    %464 = vmatprep.subr.mxu0 0.0
    %465 = vmatpush1.msra.mxu0 0.0
    %466 = vmatprep.subr.mxu0 0.0
    %467 = vmatpush1.msra.mxu0 0.0
    %468 = vmatprep.subr.mxu0 0.0
    %469 = vmatpush1.msra.mxu0 0.0
    %470 = vmatprep.subr.mxu0 0.0
    %471 = vmatpush1.msra.mxu0 %v432
    %472 = vmatprep.subr.mxu0 0.0
    %473 = vmatpush1.msra.mxu0 %v431
    %474 = vmatprep.subr.mxu0 0.0
    %475 = vmatpush1.msra.mxu0 %v430
    %476 = vmatprep.subr.mxu0 0.0
    %477 = vmatpush1.msra.mxu0 %v429
    %478 = vmatprep.subr.mxu0 0.0
    %479 = vmatpush2.msra.mxu0 0.0
    %480 = vmatprep.subr.mxu0 0.0
    %481 = vmatpush2.msra.mxu0 0.0
    %482 = vmatprep.subr.mxu0 0.0
    %483 = vmatpush2.msra.mxu0 0.0
    %484 = vmatprep.subr.mxu0 0.0
    %485 = vmatpush2.msra.mxu0 0.0
    %486 = vmatprep.subr.mxu0 0.0
    %487 = vmatpush2.msra.mxu0 0.0
    %488 = vmatprep.subr.mxu0 0.0
    %489 = vmatpush2.msra.mxu0 0.0
    %490 = vmatprep.subr.mxu0 0.0
    %491 = vmatpush2.msra.mxu0 0.0
    %492 = vmatprep.subr.mxu0 0.0
    %493 = vmatpush2.msra.mxu0 0.0
    %494 = vmatprep.subr.mxu0 0.0
    %495 = vmatpush2.msra.mxu0 0.0
    %496 = vmatprep.subr.mxu0 0.0
    %497 = vmatpush2.msra.mxu0 0.0
    %498 = vmatprep.subr.mxu0 0.0
    %499 = vmatpush2.msra.mxu0 0.0
    %500 = vmatprep.subr.mxu0 0.0
    %501 = vmatpush2.msra.mxu0 0.0
    %502 = vmatprep.subr.mxu0 0.0
    %503 = vmatpush2.msra.mxu0 0.0
    %504 = vmatprep.subr.mxu0 0.0
    %505 = vmatpush2.msra.mxu0 0.0
    %506 = vmatprep.subr.mxu0 0.0
    %507 = vmatpush2.msra.mxu0 0.0
    %508 = vmatprep.subr.mxu0 0.0
    %509 = vmatpush2.msra.mxu0 0.0
    %510 = vmatprep.mubr.f32.mxu0 0.0
    %511 = vmatmul.mubr.f32.gmra.mxu0 %v444
    %v512 = vpop.f32.mrf.mxu0
    %v513 = vadd.f32 %v438, %v512
    %v514 = vpop.f32.mrf.mxu0
    %515 = vdwg.mxu0
    %516 = vst [vmem:[#allocation6] sm:$0x3] %v513
    // Predicated region
    $region26: #{tpu_custom_call.1} parent=1 // pred_check
      _
    $region27: #{tpu_custom_call.1} parent=1 // pred_check_branch
      %518 = sbr.rel (0) target = $region29
    $region28: #{tpu_custom_call.1} parent=1 // pred_region
      %s520 = ssub.s32 32, 32
      %521 = vsyncadd [#allocation5], %s520
      %s523 = sshll.u32 [#allocation6], 4
      %s524 = int_to_ptr.vmem [resolvable:$true] %s523
      %526 = dma.vmem_to_hbm [thread:$0]  %s524, 32, %s5, [#allocation5]
    $region29: #{tpu_custom_call.1} parent=1 // pred_fallthru
      _
    // Predicated region
    $region30: #{tpu_custom_call.1} parent=1 // pred_check
      _
    $region31: #{tpu_custom_call.1} parent=1 // pred_check_branch
      %528 = sbr.rel (0) target = $region33
    $region32: #{tpu_custom_call.1} parent=1 // pred_region
      %529 = dma.done [#allocation5], 32
    $region33: #{tpu_custom_call.1} parent=1 // pred_fallthru
      _
    %530 = vsyncpa [#allocation4], 1
    %531 = vsyncpa [#allocation5], 1

</llo_original>
